<compile_context>
chip_gen: v7x
topology: tpu7x:2x2x1
jax: 0.10.0
libtpu: 0.0.40
codegen_flags: <defaults>
</compile_context>

<pallas_src>
import jax
import jax.numpy as jnp
from jax.experimental import pallas as pl
from jax.experimental.pallas import tpu as pltpu


def spotless_mlp_kernel(x_ref, w1_ref, b1_ref, w2_ref, b2_ref, o_ref):
    # x_ref:  (tm, F)  bf16 rows of the batch
    # w1_ref: (F, H)   bf16, first linear pre-transposed to (in, out)
    # b1_ref: (1, H)   f32
    # w2_ref: (C, H)   f32, PyTorch Linear layout (out, in)
    # b2_ref: (C, 1)   f32
    # o_ref:  (C, tm)  f32, lane-dense (batch rows along lanes)
    h = jnp.dot(x_ref[...], w1_ref[...], preferred_element_type=jnp.float32)
    h = jnp.maximum(h + b1_ref[...], 0.0)                       # ReLU, (tm, H) f32

    # Second linear as w2 @ h^T -> (C, tm).  Contracting both operands on
    # their last dim keeps the result lane-dense and avoids any in-kernel
    # transpose/reshape (same dimension_numbers as q @ k.T in flash attn).
    y = jax.lax.dot_general(
        w2_ref[...], h, (((1,), (1,)), ((), ())),
        preferred_element_type=jnp.float32,
    )
    y = y + b2_ref[...]                                         # (C, tm)
    o_ref[...] = jax.nn.sigmoid(y).astype(o_ref.dtype)


def spotless_forward(x, w1, b1, w2, b2, *, tm=2048):
    """sigmoid(relu(x @ w1.T + b1) @ w2.T + b2), PyTorch Linear weight layout.

    x: (N, F); w1: (H, F); b1: (H,); w2: (C, H); b2: (C,).  Returns (N, C) f32.
    """
    N, F = x.shape
    H = w1.shape[0]
    C = w2.shape[0]

    # Row tile: large enough to amortize per-grid-step overhead, but keep at
    # least 2 grid steps when possible so "parallel" can shard the row loop
    # across both TensorCores on v7x (no-op on v5e/v6e).
    n128 = pl.cdiv(N, 128) * 128
    tm = int(min(tm, max(128, (n128 // 256) * 128)))
    n_pad = pl.cdiv(N, tm) * tm

    # Stream x (and W1) as bf16; weights/bias of layer 2 stay f32 (tiny).
    x_b = x.astype(jnp.bfloat16)
    if n_pad != N:
        # TODO(synk): for N far from a tile multiple, a cdiv grid with a masked
        # last block would avoid this extra pad copy of x.
        x_b = jnp.pad(x_b, ((0, n_pad - N), (0, 0)))

    w1_t = jnp.transpose(w1).astype(jnp.bfloat16)        # (F, H)
    b1_2d = b1.reshape(1, H).astype(jnp.float32)
    w2_2d = w2.reshape(C, H).astype(jnp.float32)
    b2_2d = b2.reshape(C, 1).astype(jnp.float32)

    cost = pl.CostEstimate(
        flops=2 * N * (F * H + H * C),
        transcendentals=N * C,                            # sigmoid
        bytes_accessed=(n_pad * F * 2                     # bf16 x stream
                        + n_pad * C * 4                   # f32 output
                        + F * H * 2 + H * 4 + C * H * 4 + C * 4),
    )

    out = pl.pallas_call(
        spotless_mlp_kernel,
        out_shape=jax.ShapeDtypeStruct((C, n_pad), jnp.float32),
        grid_spec=pltpu.PrefetchScalarGridSpec(
            num_scalar_prefetch=0,
            grid=(n_pad // tm,),
            in_specs=[
                pl.BlockSpec((tm, F), lambda i: (i, 0)),  # x rows tile
                pl.BlockSpec((F, H), lambda i: (0, 0)),   # W1 (resident)
                pl.BlockSpec((1, H), lambda i: (0, 0)),   # b1
                pl.BlockSpec((C, H), lambda i: (0, 0)),   # W2
                pl.BlockSpec((C, 1), lambda i: (0, 0)),   # b2
            ],
            out_specs=pl.BlockSpec((C, tm), lambda i: (0, i)),
        ),
        compiler_params=pltpu.CompilerParams(
            dimension_semantics=("parallel",),
        ),
        cost_estimate=cost,
    )(x_b, w1_t, b1_2d, w2_2d, b2_2d)

    # (C, n_pad) -> (N, C).  For C == 1 this is a free contiguous reshape.
    return jnp.transpose(out[:, :N])


def init_params(key, num_features, num_classes, hidden=16):
    """Deterministic synthetic parameters (PyTorch Linear shapes: (out, in))."""
    k1, k2, k3, k4 = jax.random.split(key, 4)
    bound1 = 1.0 / jnp.sqrt(num_features)
    bound2 = 1.0 / jnp.sqrt(hidden)
    w1 = jax.random.uniform(k1, (hidden, num_features), jnp.float32, -bound1, bound1)
    b1 = jax.random.uniform(k2, (hidden,), jnp.float32, -bound1, bound1)
    w2 = jax.random.uniform(k3, (num_classes, hidden), jnp.float32, -bound2, bound2)
    b2 = jax.random.uniform(k4, (num_classes,), jnp.float32, -bound2, bound2)
    return w1, b1, w2, b2


if __name__ == "__main__":
    num_features = 32
    num_classes = 1
    N = 256

    key = jax.random.PRNGKey(0)
    kx, kp = jax.random.split(key)
    x = jax.random.normal(kx, (N, num_features), dtype=jnp.float32)
    w1, b1, w2, b2 = init_params(kp, num_features, num_classes)

    out = spotless_forward(x, w1, b1, w2, b2)
    out = jax.block_until_ready(out)

    # Pure-JAX reference with the same bf16 quantization of x / W1 as the kernel.
    xq = x.astype(jnp.bfloat16).astype(jnp.float32)
    w1q = w1.astype(jnp.bfloat16).astype(jnp.float32)
    ref = jax.nn.sigmoid(jnp.maximum(xq @ w1q.T + b1, 0.0) @ w2.T + b2)

    assert out.shape == (N, num_classes)
    assert jnp.allclose(out, ref, atol=1e-2, rtol=0.0), float(jnp.max(jnp.abs(out - ref)))

    print("KERNEL_OK")
</pallas_src>

<mosaic_0001>
module attributes {stable_mosaic.version = 11 : i64} {
  func.func @spotless_mlp_kernel(%arg0: i32, %arg1: memref<128x32xbf16, #tpu.memory_space<vmem>>, %arg2: memref<32x16xbf16, #tpu.memory_space<vmem>>, %arg3: memref<1x16xf32, #tpu.memory_space<vmem>>, %arg4: memref<1x16xf32, #tpu.memory_space<vmem>>, %arg5: memref<1x1xf32, #tpu.memory_space<vmem>>, %arg6: memref<1x128xf32, #tpu.memory_space<vmem>>) attributes {dimension_semantics = [#tpu.dimension_semantics<parallel>], iteration_bounds = array<i64: 2>, scalar_prefetch = 0 : i64, scratch_operands = 0 : i64, tpu.core_type = #tpu.core_type<tc>, window_params = [{transform_indices = @transform_0, window_bounds = array<i64: 128, 32>}, {pipeline_mode = #tpu.pipeline_mode<synchronous>, transform_indices = @transform_1, window_bounds = array<i64: 32, 16>}, {pipeline_mode = #tpu.pipeline_mode<synchronous>, transform_indices = @transform_2, window_bounds = array<i64: 1, 16>}, {pipeline_mode = #tpu.pipeline_mode<synchronous>, transform_indices = @transform_3, window_bounds = array<i64: 1, 16>}, {pipeline_mode = #tpu.pipeline_mode<synchronous>, transform_indices = @transform_4, window_bounds = array<i64: 1, 1>}, {transform_indices = @transform_5, window_bounds = array<i64: 1, 128>}]} {
    %c0 = arith.constant 0 : index
    %c0_0 = arith.constant 0 : index
    %0 = vector.load %arg1[%c0, %c0_0] : memref<128x32xbf16, #tpu.memory_space<vmem>>, vector<128x32xbf16>
    %c0_1 = arith.constant 0 : index
    %c0_2 = arith.constant 0 : index
    %1 = vector.load %arg2[%c0_1, %c0_2] : memref<32x16xbf16, #tpu.memory_space<vmem>>, vector<32x16xbf16>
    %cst = arith.constant dense<0.000000e+00> : vector<128x16xf32>
    %2 = tpu.matmul %0, %1, %cst {dimension_numbers = #tpu.dot_dimension_numbers<[1], [0], [0], [1], [0, 0, 1, 1], [], []>} : vector<128x32xbf16>, vector<32x16xbf16>, vector<128x16xf32> -> vector<128x16xf32>
    %c0_3 = arith.constant 0 : index
    %c0_4 = arith.constant 0 : index
    %3 = vector.load %arg3[%c0_3, %c0_4] : memref<1x16xf32, #tpu.memory_space<vmem>>, vector<1x16xf32>
    %4 = vector.broadcast %3 : vector<1x16xf32> to vector<128x16xf32>
    %5 = arith.addf %2, %4 : vector<128x16xf32>
    %cst_5 = arith.constant 0.000000e+00 : f32
    %6 = vector.broadcast %cst_5 : f32 to vector<128x16xf32>
    %7 = arith.maximumf %5, %6 : vector<128x16xf32>
    %c0_6 = arith.constant 0 : index
    %c0_7 = arith.constant 0 : index
    %8 = vector.load %arg4[%c0_6, %c0_7] : memref<1x16xf32, #tpu.memory_space<vmem>>, vector<1x16xf32>
    %cst_8 = arith.constant dense<0.000000e+00> : vector<1x128xf32>
    %9 = tpu.matmul %8, %7, %cst_8 {dimension_numbers = #tpu.dot_dimension_numbers<[1], [1], [0], [0], [0, 0, 1, 0], [], []>} : vector<1x16xf32>, vector<128x16xf32>, vector<1x128xf32> -> vector<1x128xf32>
    %c0_9 = arith.constant 0 : index
    %c0_10 = arith.constant 0 : index
    %10 = vector.load %arg5[%c0_9, %c0_10] : memref<1x1xf32, #tpu.memory_space<vmem>>, vector<1x1xf32>
    %11 = vector.broadcast %10 : vector<1x1xf32> to vector<1x128xf32>
    %12 = arith.addf %9, %11 : vector<1x128xf32>
    %13 = arith.negf %12 : vector<1x128xf32>
    %14 = math.exp %13 : vector<1x128xf32>
    %cst_11 = arith.constant 1.000000e+00 : f32
    %15 = vector.broadcast %cst_11 : f32 to vector<1x128xf32>
    %16 = arith.addf %15, %14 : vector<1x128xf32>
    %17 = arith.divf %15, %16 : vector<1x128xf32>
    %c0_12 = arith.constant 0 : index
    %c0_13 = arith.constant 0 : index
    %18 = vector.load %arg6[%c0_12, %c0_13] : memref<1x128xf32, #tpu.memory_space<vmem>>, vector<1x128xf32>
    tpu.vector_store %arg6[%c0_12, %c0_13], %17 {strides = array<i32>} : memref<1x128xf32, #tpu.memory_space<vmem>>, vector<1x128xf32>,
    return
  }
  func.func @transform_0(%arg0: i32) -> (i32, i32) {
    %c0_i32 = arith.constant 0 : i32
    %c0_i32_0 = arith.constant 0 : i32
    return %arg0, %c0_i32 : i32, i32
  }
  func.func @transform_1(%arg0: i32) -> (i32, i32) {
    %c0_i32 = arith.constant 0 : i32
    %c0_i32_0 = arith.constant 0 : i32
    %c0_i32_1 = arith.constant 0 : i32
    return %c0_i32, %c0_i32_0 : i32, i32
  }
  func.func @transform_2(%arg0: i32) -> (i32, i32) {
    %c0_i32 = arith.constant 0 : i32
    %c0_i32_0 = arith.constant 0 : i32
    %c0_i32_1 = arith.constant 0 : i32
    return %c0_i32, %c0_i32_0 : i32, i32
  }
  func.func @transform_3(%arg0: i32) -> (i32, i32) {
    %c0_i32 = arith.constant 0 : i32
    %c0_i32_0 = arith.constant 0 : i32
    %c0_i32_1 = arith.constant 0 : i32
    return %c0_i32, %c0_i32_0 : i32, i32
  }
  func.func @transform_4(%arg0: i32) -> (i32, i32) {
    %c0_i32 = arith.constant 0 : i32
    %c0_i32_0 = arith.constant 0 : i32
    %c0_i32_1 = arith.constant 0 : i32
    return %c0_i32, %c0_i32_0 : i32, i32
  }
  func.func @transform_5(%arg0: i32) -> (i32, i32) {
    %c0_i32 = arith.constant 0 : i32
    %c0_i32_0 = arith.constant 0 : i32
    return %c0_i32, %arg0 : i32, i32
  }
}

</mosaic_0001>

<llo_original>
// kernel: tpu_custom_call.1
$region0: #{tpu_custom_call.1}
  #allocation0 [shape = 'u32[]', space=smem, size = 0x4, offset = 0x4, fixed_abs, tag = 'smem constant byte address 0x4 - core index']
  #allocation1 [shape = 'u32[144,128]{1,0:T(1,128)}', space=vmem, size = 0x12000, scoped, tag = 'internal scratch']
  #allocation2 [shape = 'f32[1,1]{1,0:T(1,128)S(1)}', space=vmem, size = 0x200, scoped, tag = 'scoped memory for tpu_custom_call.1']
  %s0 = inlined_call_operand.vmem [shape: bf16[256,32], index: 0, kind: input, shape index: {}]
  %s1 = inlined_call_operand.vmem [shape: bf16[32,16], index: 1, kind: input, shape index: {}]
  %s2 = inlined_call_operand.vmem [shape: f32[1,16], index: 2, kind: input, shape index: {}]
  %s3 = inlined_call_operand.vmem [shape: f32[1,16], index: 3, kind: input, shape index: {}]
  %s4 = inlined_call_operand.<no memory space> [shape: f32[1,1], index: 4, kind: input, shape index: {}]
  %s5 = inlined_call_operand.hbm [shape: f32[1,256], index: 5, kind: output, shape index: {}]
  %s6 = sld [smem:[#allocation0]]
  $region53: #{tpu_custom_call.1} parent=0
    _
  %s8 = ssub.s32 1, %s6
  %s9 = scalar_select 0, %s8, %s6
  %v10 = vstv %s4
  %11 = vst [vmem:[#allocation2] sm:$0x1] %v10
  $region1: #{tpu_custom_call.1} parent=0
    #allocation3 [shape = 'u8[1024]{0}', space=vmem, size = 0x400, scoped, tag = 'output window, operand 0']
    #allocation4 [shape = 's32[2]{0}', space=sflag, size = 0x8, scoped, tag = 'scoped memory for tpu_custom_call.1']
    %12 = vsyncpa [#allocation4], 0
    %s13 = scalar_lea.sflag [#allocation4], 1
    %14 = vsyncpa %s13, 0
    loop: start=0, step=1, limit=4
    $region2: #{tpu_custom_call.1} parent=1 // loop_pre_header
      _
    $region3: #{tpu_custom_call.1} parent=1 // loop_header
      %s16 = sphi 0, %s20
      %p17 = scmp.ge.s32.totalorder %s16, 4
      %s26 = sphi 0, %s28
      %s29 = sphi 0, %s26
      %s30 = sphi 0, %s29
      %s46 = sphi 0, %s30
      %s50 = sphi 0, %s50
      %s52 = sphi 0, %s50
      %s53 = sphi 0, %s52
      %s67 = sphi 0, %s53
      %s71 = sphi 0, %s71
      %s73 = sphi 0, %s71
      %s74 = sphi 0, %s73
      %s88 = sphi 0, %s74
      %s92 = sphi 0, %s92
      %s94 = sphi 0, %s92
      %s95 = sphi 0, %s94
      %s109 = sphi 0, %s95
      %s113 = sphi 0, %s113
      %s115 = sphi 0, %s113
      %s116 = sphi 0, %s115
      %s130 = sphi 0, %s116
      %s136 = sphi 0, %s138
      %s139 = sphi 0, %s136
      %s140 = sphi 0, %s139
      %s156 = sphi 0, %s140
    $region4: #{tpu_custom_call.1} parent=1 // loop_header_branch
      %19 = sbr.rel (%p17) target = $region8
    $region5: #{tpu_custom_call.1} parent=1 // loop_body
      %s21 = ssub.s32 %s16, 1
      %s22 = ssub.s32 %s16, 2
      %s23 = sadd.s32 %s16, 1
      %s24 = ssub.s32 %s16, %s23
      %p25 = scmp.eq.s32.totalorder %s24, 0
      %s27 = sadd.s32 %s26, 1
      %s28 = scalar_select %p25, %s26, %s27
      %p31 = pneg %p25
      %p32 = scmp.eq.s32.totalorder %s16, 1
      %p33 = por %p31, %p32
      %p34 = scmp.ne.s32.totalorder %s26, %s29
      %p35 = scmp.eq.s32.totalorder %s16, 0
      %p36 = por %p34, %p35
      %p37 = scmp.ne.s32.totalorder %s26, %s29
      %p38 = scmp.eq.s32.totalorder %s21, 1
      %p39 = por %p37, %p38
      %p40 = scmp.ne.s32.totalorder %s29, %s30
      %p41 = scmp.eq.s32.totalorder %s21, 0
      %p42 = por %p40, %p41
      %p43 = scmp.ne.s32.totalorder %s29, %s30
      %p44 = scmp.eq.s32.totalorder %s22, 1
      %p45 = por %p43, %p44
      %p47 = scmp.ne.s32.totalorder %s30, %s46
      %p48 = scmp.eq.s32.totalorder %s22, 0
      %p49 = por %p47, %p48
      %s51 = sadd.s32 %s50, 1
      %p54 = scmp.eq.s32.totalorder %s16, 1
      %p55 = scmp.ne.s32.totalorder %s50, %s52
      %p56 = scmp.eq.s32.totalorder %s16, 0
      %p57 = por %p55, %p56
      %p58 = scmp.ne.s32.totalorder %s50, %s52
      %p59 = scmp.eq.s32.totalorder %s21, 1
      %p60 = por %p58, %p59
      %p61 = scmp.ne.s32.totalorder %s52, %s53
      %p62 = scmp.eq.s32.totalorder %s21, 0
      %p63 = por %p61, %p62
      %p64 = scmp.ne.s32.totalorder %s52, %s53
      %p65 = scmp.eq.s32.totalorder %s22, 1
      %p66 = por %p64, %p65
      %p68 = scmp.ne.s32.totalorder %s53, %s67
      %p69 = scmp.eq.s32.totalorder %s22, 0
      %p70 = por %p68, %p69
      %s72 = sadd.s32 %s71, 1
      %p75 = scmp.eq.s32.totalorder %s16, 1
      %p76 = scmp.ne.s32.totalorder %s71, %s73
      %p77 = scmp.eq.s32.totalorder %s16, 0
      %p78 = por %p76, %p77
      %p79 = scmp.ne.s32.totalorder %s71, %s73
      %p80 = scmp.eq.s32.totalorder %s21, 1
      %p81 = por %p79, %p80
      %p82 = scmp.ne.s32.totalorder %s73, %s74
      %p83 = scmp.eq.s32.totalorder %s21, 0
      %p84 = por %p82, %p83
      %p85 = scmp.ne.s32.totalorder %s73, %s74
      %p86 = scmp.eq.s32.totalorder %s22, 1
      %p87 = por %p85, %p86
      %p89 = scmp.ne.s32.totalorder %s74, %s88
      %p90 = scmp.eq.s32.totalorder %s22, 0
      %p91 = por %p89, %p90
      %s93 = sadd.s32 %s92, 1
      %p96 = scmp.eq.s32.totalorder %s16, 1
      %p97 = scmp.ne.s32.totalorder %s92, %s94
      %p98 = scmp.eq.s32.totalorder %s16, 0
      %p99 = por %p97, %p98
      %p100 = scmp.ne.s32.totalorder %s92, %s94
      %p101 = scmp.eq.s32.totalorder %s21, 1
      %p102 = por %p100, %p101
      %p103 = scmp.ne.s32.totalorder %s94, %s95
      %p104 = scmp.eq.s32.totalorder %s21, 0
      %p105 = por %p103, %p104
      %p106 = scmp.ne.s32.totalorder %s94, %s95
      %p107 = scmp.eq.s32.totalorder %s22, 1
      %p108 = por %p106, %p107
      %p110 = scmp.ne.s32.totalorder %s95, %s109
      %p111 = scmp.eq.s32.totalorder %s22, 0
      %p112 = por %p110, %p111
      %s114 = sadd.s32 %s113, 1
      %p117 = scmp.eq.s32.totalorder %s16, 1
      %p118 = scmp.ne.s32.totalorder %s113, %s115
      %p119 = scmp.eq.s32.totalorder %s16, 0
      %p120 = por %p118, %p119
      %p121 = scmp.ne.s32.totalorder %s113, %s115
      %p122 = scmp.eq.s32.totalorder %s21, 1
      %p123 = por %p121, %p122
      %p124 = scmp.ne.s32.totalorder %s115, %s116
      %p125 = scmp.eq.s32.totalorder %s21, 0
      %p126 = por %p124, %p125
      %p127 = scmp.ne.s32.totalorder %s115, %s116
      %p128 = scmp.eq.s32.totalorder %s22, 1
      %p129 = por %p127, %p128
      %p131 = scmp.ne.s32.totalorder %s116, %s130
      %p132 = scmp.eq.s32.totalorder %s22, 0
      %p133 = por %p131, %p132
      %s134 = ssub.s32 %s16, %s23
      %p135 = scmp.eq.s32.totalorder %s134, 0
      %s137 = sadd.s32 %s136, 1
      %s138 = scalar_select %p135, %s136, %s137
      %p141 = pneg %p135
      %p142 = scmp.eq.s32.totalorder %s16, 1
      %p143 = por %p141, %p142
      %p144 = scmp.ne.s32.totalorder %s136, %s139
      %p145 = scmp.eq.s32.totalorder %s16, 0
      %p146 = por %p144, %p145
      %p147 = scmp.ne.s32.totalorder %s136, %s139
      %p148 = scmp.eq.s32.totalorder %s21, 1
      %p149 = por %p147, %p148
      %p150 = scmp.ne.s32.totalorder %s139, %s140
      %p151 = scmp.eq.s32.totalorder %s21, 0
      %p152 = por %p150, %p151
      %p153 = scmp.ne.s32.totalorder %s139, %s140
      %p154 = scmp.eq.s32.totalorder %s22, 1
      %p155 = por %p153, %p154
      %p157 = scmp.ne.s32.totalorder %s140, %s156
      %p158 = scmp.eq.s32.totalorder %s22, 0
      %p159 = por %p157, %p158
      %p160 = scmp.le.s32.totalorder 1, %s16
      %p161 = scmp.lt.s32.totalorder %s16, 3
      %p162 = pnand %p160, %p161
      %p163 = pneg %p162
      // Predicated region
      $region9: #{tpu_custom_call.1} parent=5 // pred_check
        _
      $region10: #{tpu_custom_call.1} parent=5 // pred_check_branch
        %165 = sbr.rel (%p162) target = $region12
      $region11: #{tpu_custom_call.1} parent=5 // pred_region
        %s166 = ssub.s32 %s16, 1
        // Predicated region
        $region13: #{tpu_custom_call.1} parent=11 // pred_check
          %p167 = pneg %p63
        $region14: #{tpu_custom_call.1} parent=11 // pred_check_branch
          %169 = sbr.rel (%p167) target = $region16
        $region15: #{tpu_custom_call.1} parent=11 // pred_region
          _
        $region16: #{tpu_custom_call.1} parent=11 // pred_fallthru
          _
        // Predicated region
        $region17: #{tpu_custom_call.1} parent=11 // pred_check
          %p170 = pneg %p84
        $region18: #{tpu_custom_call.1} parent=11 // pred_check_branch
          %172 = sbr.rel (%p170) target = $region20
        $region19: #{tpu_custom_call.1} parent=11 // pred_region
          _
        $region20: #{tpu_custom_call.1} parent=11 // pred_fallthru
          _
        // Predicated region
        $region21: #{tpu_custom_call.1} parent=11 // pred_check
          %p173 = pneg %p105
        $region22: #{tpu_custom_call.1} parent=11 // pred_check_branch
          %175 = sbr.rel (%p173) target = $region24
        $region23: #{tpu_custom_call.1} parent=11 // pred_region
          _
        $region24: #{tpu_custom_call.1} parent=11 // pred_fallthru
          _
        // Predicated region
        $region25: #{tpu_custom_call.1} parent=11 // pred_check
          %p176 = pneg %p126
        $region26: #{tpu_custom_call.1} parent=11 // pred_check_branch
          %178 = sbr.rel (%p176) target = $region28
        $region27: #{tpu_custom_call.1} parent=11 // pred_region
          _
        $region28: #{tpu_custom_call.1} parent=11 // pred_fallthru
          _
      $region12: #{tpu_custom_call.1} parent=5 // pred_fallthru
        _
      %p179 = scmp.lt.s32.totalorder %s16, 2
      // Predicated region
      $region29: #{tpu_custom_call.1} parent=5 // pred_check
        %p180 = pneg %p179
      $region30: #{tpu_custom_call.1} parent=5 // pred_check_branch
        %182 = sbr.rel (%p180) target = $region32
      $region31: #{tpu_custom_call.1} parent=5 // pred_region
        // Predicated region
        $region33: #{tpu_custom_call.1} parent=31 // pred_check
          %p183 = pneg %p36
        $region34: #{tpu_custom_call.1} parent=31 // pred_check_branch
          %185 = sbr.rel (%p183) target = $region36
        $region35: #{tpu_custom_call.1} parent=31 // pred_region
          %s186 = smul.u32 16, %s16
          %p187 = scmp.lt.s32.totalorder %s186, 31
          %s188 = scalar_select %p187, %s186, 31
          %s189 = smul.addr %s188, 4
          %s190 = scalar_lea.vmem %s0, %s189
          %s191 = smul.u32 16, %s16
        $region36: #{tpu_custom_call.1} parent=31 // pred_fallthru
          _
      $region32: #{tpu_custom_call.1} parent=5 // pred_fallthru
        _
      %p192 = scmp.le.s32.totalorder 1, %s16
      %p193 = scmp.lt.s32.totalorder %s16, 3
      %p194 = pnand %p192, %p193
      %p195 = pneg %p194
      // Predicated region
      $region37: #{tpu_custom_call.1} parent=5 // pred_check
        _
      $region38: #{tpu_custom_call.1} parent=5 // pred_check_branch
        %197 = sbr.rel (%p194) target = $region40
      $region39: #{tpu_custom_call.1} parent=5 // pred_region
        %s198 = ssub.s32 %s16, 1
        %s199 = smul.u32 16, %s21
        %p200 = scmp.lt.s32.totalorder %s199, 31
        %s201 = scalar_select %p200, %s199, 31
        %s202 = smul.addr %s201, 4
        %s203 = scalar_lea.vmem %s0, %s202
        %p204 = pneg %p42
        %p205 = pneg %p39
        %p206 = pneg %p63
        %p207 = pneg %p60
        %p208 = pneg %p84
        %p209 = pneg %p81
        %p210 = pneg %p105
        %p211 = pneg %p102
        %p212 = pneg %p126
        %p213 = pneg %p123
        %p214 = pneg %p152
        %p215 = pneg %p149
        %s216 = sand.u32 %s139, 1
        %s217 = scalar_lea.sflag [#allocation4], %s216
        %s218 = sand.u32 %s139, 1
        %s219 = scalar_lea.vmem [#allocation3], %s218
        %s220 = smul.u32 16, %s21
        %p221 = scmp.lt.s32.totalorder %s220, 31
        %s222 = scalar_select %p221, %s220, 31
        %s223 = smul.addr %s222, 4
        %s224 = scalar_lea.vmem %s0, %s223
        %s225 = smul.u32 16, %s21
        %v227 = vld [vmem:[%s224] sm:$0xf]
        %v228 = vld [vmem:[%s224 + $0x4] sm:$0xf]
        %v229 = vld [vmem:[%s224 + $0x8] sm:$0xf]
        %v230 = vld [vmem:[%s224 + $0xc] sm:$0xf]
        %v231 = vld [vmem:[%s224 + $0x10] sm:$0xf]
        %v232 = vld [vmem:[%s224 + $0x14] sm:$0xf]
        %v233 = vld [vmem:[%s224 + $0x18] sm:$0xf]
        %v234 = vld [vmem:[%s224 + $0x1c] sm:$0xf]
        %v235 = vld [vmem:[%s224 + $0x20] sm:$0xf]
        %v236 = vld [vmem:[%s224 + $0x24] sm:$0xf]
        %v237 = vld [vmem:[%s224 + $0x28] sm:$0xf]
        %v238 = vld [vmem:[%s224 + $0x2c] sm:$0xf]
        %v239 = vld [vmem:[%s224 + $0x30] sm:$0xf]
        %v240 = vld [vmem:[%s224 + $0x34] sm:$0xf]
        %v241 = vld [vmem:[%s224 + $0x38] sm:$0xf]
        %v242 = vld [vmem:[%s224 + $0x3c] sm:$0xf]
        %v243 = vld [vmem:[%s1] sm:$0xf]
        %v244 = vld [vmem:[%s1 + $0x4] sm:$0xf]
        %v245 = vld [vmem:[%s1 + $0x8] sm:$0xf]
        %v246 = vld [vmem:[%s1 + $0xc] sm:$0xf]
        %v247 = vld [vmem:[%s2] sm:$0x1]
        %v249 = vlaneseq
        %v250 = vshrl.u32 %v249, 7
        %v251 = vsub.s32 0, %v250
        %v252 = vrot.slane %v247, %v251
        %v270 = vunpack.c.l.b16 %v227
        %v271 = vunpack.c.l.b16 %v228
        %v272 = vunpack.c.l.b16 %v229
        %v273 = vunpack.c.l.b16 %v230
        %v274 = vunpack.c.l.b16 %v231
        %v275 = vunpack.c.l.b16 %v232
        %v276 = vunpack.c.l.b16 %v233
        %v277 = vunpack.c.l.b16 %v234
        %v278 = vunpack.c.l.b16 %v235
        %v279 = vunpack.c.l.b16 %v236
        %v280 = vunpack.c.l.b16 %v237
        %v281 = vunpack.c.l.b16 %v238
        %v282 = vunpack.c.l.b16 %v239
        %v283 = vunpack.c.l.b16 %v240
        %v284 = vunpack.c.l.b16 %v241
        %v285 = vunpack.c.l.b16 %v242
        %v286 = vpack.c.b16 %v271, %v270
        %v287 = vpack.c.b16 %v273, %v272
        %v288 = vpack.c.b16 %v275, %v274
        %v289 = vpack.c.b16 %v277, %v276
        %v290 = vpack.c.b16 %v279, %v278
        %v291 = vpack.c.b16 %v281, %v280
        %v292 = vpack.c.b16 %v283, %v282
        %v293 = vpack.c.b16 %v285, %v284
        %v298 = vunpack.c.l.b16 %v243
        %v299 = vunpack.c.l.b16 %v244
        %v300 = vunpack.c.l.b16 %v245
        %v301 = vunpack.c.l.b16 %v246
        %v302 = vpack.c.b16 %v299, %v298
        %v303 = vpack.c.b16 %v301, %v300
        %vm306 = vcmask 261120
        %v308 = vsel %vm306, %v286, 0
        %v311 = vsel %vm306, %v287, 0
        %v314 = vsel %vm306, %v288, 0
        %v317 = vsel %vm306, %v289, 0
        %v320 = vsel %vm306, %v290, 0
        %v323 = vsel %vm306, %v291, 0
        %v326 = vsel %vm306, %v292, 0
        %v329 = vsel %vm306, %v293, 0
        %331 = vmatprep.subr.bf16.mxu0 0
        %332 = vmatpush1.bf16.msra.mxu0 %v302
        %333 = vmatprep.subr.bf16.mxu0 0
        %334 = vmatpush1.bf16.msra.mxu0 %v303
        %335 = vmatprep.subr.bf16.mxu0 0
        %336 = vmatpush1.bf16.msra.mxu0 0
        %337 = vmatprep.subr.bf16.mxu0 0
        %338 = vmatpush1.bf16.msra.mxu0 0
        %339 = vmatprep.subr.bf16.mxu0 0
        %340 = vmatpush1.bf16.msra.mxu0 0
        %341 = vmatprep.subr.bf16.mxu0 0
        %342 = vmatpush1.bf16.msra.mxu0 0
        %343 = vmatprep.subr.bf16.mxu0 0
        %344 = vmatpush1.bf16.msra.mxu0 0
        %345 = vmatprep.subr.bf16.mxu0 0
        %346 = vmatpush1.bf16.msra.mxu0 0
        %347 = vmatprep.subr.bf16.mxu0 0
        %348 = vmatpush1.bf16.msra.mxu0 0
        %349 = vmatprep.subr.bf16.mxu0 0
        %350 = vmatpush1.bf16.msra.mxu0 0
        %351 = vmatprep.subr.bf16.mxu0 0
        %352 = vmatpush1.bf16.msra.mxu0 0
        %353 = vmatprep.subr.bf16.mxu0 0
        %354 = vmatpush1.bf16.msra.mxu0 0
        %355 = vmatprep.subr.bf16.mxu0 0
        %356 = vmatpush1.bf16.msra.mxu0 0
        %357 = vmatprep.subr.bf16.mxu0 0
        %358 = vmatpush1.bf16.msra.mxu0 0
        %359 = vmatprep.subr.bf16.mxu0 0
        %360 = vmatpush1.bf16.msra.mxu0 0
        %361 = vmatprep.subr.bf16.mxu0 0
        %362 = vmatpush1.bf16.msra.mxu0 0
        %363 = vmatprep.mubr.bf16.mxu0 0
        %364 = vmatmul.mubr.bf16.gmra.mrb[0].mxu0 %v308
        %v365 = vpop.f32.mrb[0].mxu0
        %v366 = vadd.f32 %v252, %v365
        %v367 = vpop.f32.mrb[0].mxu0
        %v368 = vpop.f32.mrb[0].mxu0
        %v369 = vadd.f32 %v252, %v368
        %v370 = vpop.f32.mrb[0].mxu0
        %371 = vmatprep.mubr.bf16.mxu0 0
        %372 = vmatmul.mubr.bf16.gmra.mrb[0].mxu0 %v311
        %v373 = vpop.f32.mrb[0].mxu0
        %v374 = vadd.f32 %v252, %v373
        %v375 = vpop.f32.mrb[0].mxu0
        %v376 = vpop.f32.mrb[0].mxu0
        %v377 = vadd.f32 %v252, %v376
        %v378 = vpop.f32.mrb[0].mxu0
        %379 = vmatprep.mubr.bf16.mxu0 0
        %380 = vmatmul.mubr.bf16.gmra.mrb[0].mxu0 %v314
        %v381 = vpop.f32.mrb[0].mxu0
        %v382 = vadd.f32 %v252, %v381
        %v383 = vpop.f32.mrb[0].mxu0
        %v384 = vpop.f32.mrb[0].mxu0
        %v385 = vadd.f32 %v252, %v384
        %v386 = vpop.f32.mrb[0].mxu0
        %387 = vmatprep.mubr.bf16.mxu0 0
        %388 = vmatmul.mubr.bf16.gmra.mrb[0].mxu0 %v317
        %v389 = vpop.f32.mrb[0].mxu0
        %v390 = vadd.f32 %v252, %v389
        %v391 = vpop.f32.mrb[0].mxu0
        %v392 = vpop.f32.mrb[0].mxu0
        %v393 = vadd.f32 %v252, %v392
        %v394 = vpop.f32.mrb[0].mxu0
        %395 = vmatprep.mubr.bf16.mxu0 0
        %396 = vmatmul.mubr.bf16.gmra.mrb[0].mxu0 %v320
        %v397 = vpop.f32.mrb[0].mxu0
        %v398 = vadd.f32 %v252, %v397
        %v399 = vpop.f32.mrb[0].mxu0
        %v400 = vpop.f32.mrb[0].mxu0
        %v401 = vadd.f32 %v252, %v400
        %v402 = vpop.f32.mrb[0].mxu0
        %403 = vmatprep.mubr.bf16.mxu0 0
        %404 = vmatmul.mubr.bf16.gmra.mrb[0].mxu0 %v323
        %v405 = vpop.f32.mrb[0].mxu0
        %v406 = vadd.f32 %v252, %v405
        %v407 = vpop.f32.mrb[0].mxu0
        %v408 = vpop.f32.mrb[0].mxu0
        %v409 = vadd.f32 %v252, %v408
        %v410 = vpop.f32.mrb[0].mxu0
        %411 = vmatprep.mubr.bf16.mxu0 0
        %412 = vmatmul.mubr.bf16.gmra.mrb[0].mxu0 %v326
        %v413 = vpop.f32.mrb[0].mxu0
        %v414 = vadd.f32 %v252, %v413
        %v415 = vpop.f32.mrb[0].mxu0
        %v416 = vpop.f32.mrb[0].mxu0
        %v417 = vadd.f32 %v252, %v416
        %v418 = vpop.f32.mrb[0].mxu0
        %419 = vmatprep.mubr.bf16.mxu0 0
        %420 = vmatmul.mubr.bf16.gmra.mrb[0].mxu0 %v329
        %v421 = vpop.f32.mrb[0].mxu0
        %v422 = vadd.f32 %v252, %v421
        %v423 = vpop.f32.mrb[0].mxu0
        %v424 = vpop.f32.mrb[0].mxu0
        %v425 = vadd.f32 %v252, %v424
        %v426 = vpop.f32.mrb[0].mxu0
        %427 = vdwg.mxu0
        %v428 = vmax.f32 %v366, 0.0
        %v429 = vmax.f32 %v369, 0.0
        %v430 = vmax.f32 %v374, 0.0
        %v431 = vmax.f32 %v377, 0.0
        %v432 = vmax.f32 %v382, 0.0
        %v433 = vmax.f32 %v385, 0.0
        %v434 = vmax.f32 %v390, 0.0
        %v435 = vmax.f32 %v393, 0.0
        %v436 = vmax.f32 %v398, 0.0
        %v437 = vmax.f32 %v401, 0.0
        %v438 = vmax.f32 %v406, 0.0
        %v439 = vmax.f32 %v409, 0.0
        %v440 = vmax.f32 %v414, 0.0
        %v441 = vmax.f32 %v417, 0.0
        %v442 = vmax.f32 %v422, 0.0
        %v443 = vmax.f32 %v425, 0.0
        %v444 = vld [vmem:[%s3] sm:$0x1]
        %v445 = vld [vmem:[#allocation2] sm:$0x1]
        %447 = vset.pattern.permute.xlu0 0
        %448 = vperm.xlu0 %447, %v445
        %v449 = vpop.permute.xlu0 %448
        %v451 = vlaneseq
        %v452 = vshrl.u32 %v451, 7
        %v453 = vsub.s32 0, %v452
        %v454 = vrot.slane %v449, %v453
        %vm455 = vcmask 130048
        %v457 = vsel %vm455, %v444, 0
        %v460 = vsel %vm455, %v428, 0
        %v463 = vsel %vm455, %v429, 0
        %v466 = vsel %vm455, %v430, 0
        %v469 = vsel %vm455, %v431, 0
        %v472 = vsel %vm455, %v432, 0
        %v475 = vsel %vm455, %v433, 0
        %v478 = vsel %vm455, %v434, 0
        %v481 = vsel %vm455, %v435, 0
        %v484 = vsel %vm455, %v436, 0
        %v487 = vsel %vm455, %v437, 0
        %v490 = vsel %vm455, %v438, 0
        %v493 = vsel %vm455, %v439, 0
        %v496 = vsel %vm455, %v440, 0
        %v499 = vsel %vm455, %v441, 0
        %v502 = vsel %vm455, %v442, 0
        %v505 = vsel %vm455, %v443, 0
        %507 = vmatprep.subr.mxu0 0.0
        %508 = vmatpush1.xpose.msra.mxu0 %v460
        %509 = vmatprep.subr.mxu0 0.0
        %510 = vmatpush1.xpose.msra.mxu0 %v463
        %511 = vmatprep.subr.mxu0 0.0
        %512 = vmatpush1.xpose.msra.mxu0 %v466
        %513 = vmatprep.subr.mxu0 0.0
        %514 = vmatpush1.xpose.msra.mxu0 %v469
        %515 = vmatprep.subr.mxu0 0.0
        %516 = vmatpush1.xpose.msra.mxu0 %v472
        %517 = vmatprep.subr.mxu0 0.0
        %518 = vmatpush1.xpose.msra.mxu0 %v475
        %519 = vmatprep.subr.mxu0 0.0
        %520 = vmatpush1.xpose.msra.mxu0 %v478
        %521 = vmatprep.subr.mxu0 0.0
        %522 = vmatpush1.xpose.msra.mxu0 %v481
        %523 = vmatprep.subr.mxu0 0.0
        %524 = vmatpush1.xpose.msra.mxu0 %v484
        %525 = vmatprep.subr.mxu0 0.0
        %526 = vmatpush1.xpose.msra.mxu0 %v487
        %527 = vmatprep.subr.mxu0 0.0
        %528 = vmatpush1.xpose.msra.mxu0 %v490
        %529 = vmatprep.subr.mxu0 0.0
        %530 = vmatpush1.xpose.msra.mxu0 %v493
        %531 = vmatprep.subr.mxu0 0.0
        %532 = vmatpush1.xpose.msra.mxu0 %v496
        %533 = vmatprep.subr.mxu0 0.0
        %534 = vmatpush1.xpose.msra.mxu0 %v499
        %535 = vmatprep.subr.mxu0 0.0
        %536 = vmatpush1.xpose.msra.mxu0 %v502
        %537 = vmatprep.subr.mxu0 0.0
        %538 = vmatpush1.xpose.msra.mxu0 %v505
        %539 = vmatprep.subr.mxu0 0.0
        %540 = vmatpush1.xpose.msra.mxu0 0.0
        %541 = vmatprep.subr.mxu0 0.0
        %542 = vmatpush1.xpose.msra.mxu0 0.0
        %543 = vmatprep.subr.mxu0 0.0
        %544 = vmatpush1.xpose.msra.mxu0 0.0
        %545 = vmatprep.subr.mxu0 0.0
        %546 = vmatpush1.xpose.msra.mxu0 0.0
        %547 = vmatprep.subr.mxu0 0.0
        %548 = vmatpush1.xpose.msra.mxu0 0.0
        %549 = vmatprep.subr.mxu0 0.0
        %550 = vmatpush1.xpose.msra.mxu0 0.0
        %551 = vmatprep.subr.mxu0 0.0
        %552 = vmatpush1.xpose.msra.mxu0 0.0
        %553 = vmatprep.subr.mxu0 0.0
        %554 = vmatpush1.xpose.msra.mxu0 0.0
        %555 = vmatprep.subr.mxu0 0.0
        %556 = vmatpush1.xpose.msra.mxu0 0.0
        %557 = vmatprep.subr.mxu0 0.0
        %558 = vmatpush1.xpose.msra.mxu0 0.0
        %559 = vmatprep.subr.mxu0 0.0
        %560 = vmatpush1.xpose.msra.mxu0 0.0
        %561 = vmatprep.subr.mxu0 0.0
        %562 = vmatpush1.xpose.msra.mxu0 0.0
        %563 = vmatprep.subr.mxu0 0.0
        %564 = vmatpush1.xpose.msra.mxu0 0.0
        %565 = vmatprep.subr.mxu0 0.0
        %566 = vmatpush1.xpose.msra.mxu0 0.0
        %567 = vmatprep.subr.mxu0 0.0
        %568 = vmatpush1.xpose.msra.mxu0 0.0
        %569 = vmatprep.subr.mxu0 0.0
        %570 = vmatpush1.xpose.msra.mxu0 0.0
        %571 = vmatprep.mubr.f32.mxu0 0.0
        %572 = vmatmul.mubr.f32.gmra.mrb[0].mxu0 %v457
        %v573 = vpop.f32.mrb[0].mxu0
        %v574 = vadd.f32 %v454, %v573
        %v575 = vpop.f32.mrb[0].mxu0
        %576 = vdwg.mxu0
        %v577 = vxor.u32 %v574, 2147483648
        %v578 = vmul.f32 %v577, 1.442695
        %v579 = vpow.pop %v578
        %v580 = vadd.f32 %v579, 1.0
        %v581 = vrcp.pop %v580
        %v582 = vmul.f32 1.0, %v581
        %583 = vst [vmem:[%s219] sm:$0x1] %v582
        %s584 = sand.u32 %s139, 1
        %s585 = scalar_lea.sflag [#allocation4], %s584
        %s586 = sand.u32 %s139, 1
        %s587 = scalar_lea.vmem [#allocation3], %s586
        // Predicated region
        $region41: #{tpu_custom_call.1} parent=39 // pred_check
          %p588 = pneg %p149
        $region42: #{tpu_custom_call.1} parent=39 // pred_check_branch
          %590 = sbr.rel (%p588) target = $region44
        $region43: #{tpu_custom_call.1} parent=39 // pred_region
          %s592 = ssub.s32 16, 16
          %593 = vsyncadd %s585, %s592
          %s594 = smul.addr %s21, 16
          %s595 = scalar_lea.hbm %s5, %s594
          %s597 = sshll.u32 %s587, 4
          %s598 = int_to_ptr.vmem [resolvable:$true] %s597
          %600 = dma.vmem_to_hbm [thread:$0]  %s598, 16, %s595, %s585
        $region44: #{tpu_custom_call.1} parent=39 // pred_fallthru
          _
      $region40: #{tpu_custom_call.1} parent=5 // pred_fallthru
        _
      %p601 = scmp.le.s32.totalorder 2, %s16
      // Predicated region
      $region45: #{tpu_custom_call.1} parent=5 // pred_check
        %p602 = pneg %p601
      $region46: #{tpu_custom_call.1} parent=5 // pred_check_branch
        %604 = sbr.rel (%p602) target = $region48
      $region47: #{tpu_custom_call.1} parent=5 // pred_region
        %s605 = ssub.s32 %s16, 2
        // Predicated region
        $region49: #{tpu_custom_call.1} parent=47 // pred_check
          %p606 = pneg %p155
        $region50: #{tpu_custom_call.1} parent=47 // pred_check_branch
          %608 = sbr.rel (%p606) target = $region52
        $region51: #{tpu_custom_call.1} parent=47 // pred_region
          %s609 = sand.u32 %s140, 1
          %s610 = scalar_lea.sflag [#allocation4], %s609
          %s611 = sand.u32 %s140, 1
          %s612 = scalar_lea.vmem [#allocation3], %s611
          %613 = dma.done %s610, 16
        $region52: #{tpu_custom_call.1} parent=47 // pred_fallthru
          _
      $region48: #{tpu_custom_call.1} parent=5 // pred_fallthru
        _
    $region6: #{tpu_custom_call.1} parent=1 // loop_footer
      %s20 = sadd.s32 1, %s16
    $region7: #{tpu_custom_call.1} parent=1 // loop_footer_branch
      %15 = sbr.rel target = $region3
    $region8: #{tpu_custom_call.1} parent=1 // loop_exit
      _
    %614 = vsyncpa [#allocation4], 1
    %s615 = scalar_lea.sflag [#allocation4], 1
    %616 = vsyncpa %s615, 1

</llo_original>
